<compile_context>
chip_gen: v7x
topology: tpu7x:2x2x1
jax: 0.10.0
libtpu: 0.0.40
codegen_flags: <defaults>
</compile_context>

<pallas_src>
import jax
import jax.numpy as jnp
from jax.experimental import pallas as pl
from jax.experimental.pallas import tpu as pltpu

_COS_EPS = 1e-8   # torch.nn.CosineSimilarity default eps
_MSE_EPS = 1e-6   # torch.nn.PairwiseDistance default eps


def _cosine_dist_kernel(x1_ref, x2_ref, o_ref):
    x1 = x1_ref[...].astype(jnp.float32)
    x2 = x2_ref[...].astype(jnp.float32)
    dot = jnp.sum(x1 * x2, axis=-1, keepdims=True)
    n1sq = jnp.sum(x1 * x1, axis=-1, keepdims=True)
    n2sq = jnp.sum(x2 * x2, axis=-1, keepdims=True)
    # 1 - dot / max(sqrt(n1sq)*sqrt(n2sq), eps)
    #   == 1 - dot * rsqrt(max(n1sq*n2sq, eps^2))   (operands >= 0)
    inv_denom = jax.lax.rsqrt(jnp.maximum(n1sq * n2sq, _COS_EPS * _COS_EPS))
    o_ref[...] = (1.0 - dot * inv_denom).astype(o_ref.dtype)


def _pairwise_dist_kernel(x1_ref, x2_ref, o_ref):
    x1 = x1_ref[...].astype(jnp.float32)
    x2 = x2_ref[...].astype(jnp.float32)
    d = x1 - x2 + _MSE_EPS
    o_ref[...] = jnp.sqrt(jnp.sum(d * d, axis=-1, keepdims=True)).astype(o_ref.dtype)


def _pick_batch_tile(B, D, itemsize):
    """Largest batch tile (multiple of 8) whose pipeline footprint fits VMEM."""
    try:
        vmem_cap = pltpu.get_tpu_info().vmem_capacity_bytes
    except Exception:  # pragma: no cover - conservative fallback
        vmem_cap = 64 * 1024 * 1024
    # Budget for the input pipeline: 2 inputs x 2 double buffers x (TB*D*itemsize).
    # Stay well under the scoped-VMEM default on every generation
    # (16 MiB v5e, 32 MiB v6e/v7x scoped; v7x has only 64 MiB physical).
    budget = min(vmem_cap // 8, 8 * 1024 * 1024)
    per_row_bytes = 4 * D * itemsize  # 2 inputs x 2 pipeline buffers
    tb = max(budget // per_row_bytes, 8)
    tb = (tb // 8) * 8
    if tb >= B:
        # Single block with full-extent batch dim (no (8,128) divisibility
        # requirement when the block equals the array extent).
        return B
    return int(tb)


def dist_forward(x1, x2, crit, *, tile_b=None):
    """Pallas implementation of Dist.forward.

    x1, x2: (B, D) arrays. Returns (B,) array, matching PyTorch semantics.
    """
    assert x1.shape == x2.shape and x1.ndim == 2
    B, D = x1.shape
    out_dtype = jnp.result_type(x1.dtype, x2.dtype)
    kernel = _pairwise_dist_kernel if crit == "mse" else _cosine_dist_kernel

    itemsize = max(jnp.dtype(x1.dtype).itemsize, jnp.dtype(x2.dtype).itemsize)
    tb = tile_b if tile_b is not None else _pick_batch_tile(B, D, itemsize)
    tb = min(tb, B)
    grid = (pl.cdiv(B, tb),)

    out = pl.pallas_call(
        kernel,
        out_shape=jax.ShapeDtypeStruct((B, 1), out_dtype),
        grid_spec=pl.GridSpec(
            grid=grid,
            in_specs=[
                pl.BlockSpec((tb, D), lambda i: (i, 0)),
                pl.BlockSpec((tb, D), lambda i: (i, 0)),
            ],
            out_specs=pl.BlockSpec((tb, 1), lambda i: (i, 0)),
        ),
        compiler_params=pltpu.CompilerParams(
            # Batch axis has no cross-step carry -> parallel (megacore on v7x).
            dimension_semantics=("parallel",),
        ),
    )(x1, x2)
    return out[:, 0]


def _reference(x1, x2, crit):
    x1 = x1.astype(jnp.float32)
    x2 = x2.astype(jnp.float32)
    if crit == "mse":
        d = x1 - x2 + _MSE_EPS
        return jnp.sqrt(jnp.sum(d * d, axis=-1))
    dot = jnp.sum(x1 * x2, axis=-1)
    n1 = jnp.linalg.norm(x1, axis=-1)
    n2 = jnp.linalg.norm(x2, axis=-1)
    return 1.0 - dot / jnp.maximum(n1 * n2, _COS_EPS)


if __name__ == "__main__":
    key = jax.random.PRNGKey(0)
    ok = True

    # Small shapes consistent with the module (batch=8, hidden=32): single tile.
    k1, k2 = jax.random.split(key)
    B, D = 8, 32
    x1 = jax.random.normal(k1, (B, D), dtype=jnp.float32)
    x2 = jax.random.normal(k2, (B, D), dtype=jnp.float32)
    for crit in ("cosine", "mse"):
        out = jax.block_until_ready(dist_forward(x1, x2, crit))
        ref = _reference(x1, x2, crit)
        if not jnp.allclose(out, ref.astype(out.dtype), atol=1e-5, rtol=1e-5):
            ok = False

    # Exercise the multi-tile (pipelined) path with a forced small tile.
    k3, k4 = jax.random.split(k2)
    Bt, Dt = 32, 128
    y1 = jax.random.normal(k3, (Bt, Dt), dtype=jnp.float32)
    y2 = jax.random.normal(k4, (Bt, Dt), dtype=jnp.float32)
    for crit in ("cosine", "mse"):
        out = jax.block_until_ready(dist_forward(y1, y2, crit, tile_b=8))
        ref = _reference(y1, y2, crit)
        if not jnp.allclose(out, ref.astype(out.dtype), atol=1e-5, rtol=1e-5):
            ok = False

    if ok:
        print("KERNEL_OK")
</pallas_src>

<mosaic_0001>
module attributes {stable_mosaic.version = 11 : i64} {
  func.func @_cosine_dist_kernel(%arg0: i32, %arg1: memref<8x32xf32, #tpu.memory_space<vmem>>, %arg2: memref<8x32xf32, #tpu.memory_space<vmem>>, %arg3: memref<8x1xf32, #tpu.memory_space<vmem>>) attributes {dimension_semantics = [#tpu.dimension_semantics<parallel>], iteration_bounds = array<i64: 1>, scalar_prefetch = 0 : i64, scratch_operands = 0 : i64, tpu.core_type = #tpu.core_type<tc>, window_params = [{transform_indices = @transform_0, window_bounds = array<i64: 8, 32>}, {transform_indices = @transform_1, window_bounds = array<i64: 8, 32>}, {transform_indices = @transform_2, window_bounds = array<i64: 8, 1>}]} {
    %c0 = arith.constant 0 : index
    %c0_0 = arith.constant 0 : index
    %0 = vector.load %arg1[%c0, %c0_0] : memref<8x32xf32, #tpu.memory_space<vmem>>, vector<8x32xf32>
    %c0_1 = arith.constant 0 : index
    %c0_2 = arith.constant 0 : index
    %1 = vector.load %arg2[%c0_1, %c0_2] : memref<8x32xf32, #tpu.memory_space<vmem>>, vector<8x32xf32>
    %2 = arith.mulf %0, %1 : vector<8x32xf32>
    %cst = arith.constant dense<0.000000e+00> : vector<8xf32>
    %3 = vector.multi_reduction <add>, %2, %cst [1] : vector<8x32xf32> to vector<8xf32>
    %4 = vector.shape_cast %3 : vector<8xf32> to vector<8x1xf32>
    %5 = arith.mulf %0, %0 : vector<8x32xf32>
    %cst_3 = arith.constant dense<0.000000e+00> : vector<8xf32>
    %6 = vector.multi_reduction <add>, %5, %cst_3 [1] : vector<8x32xf32> to vector<8xf32>
    %7 = vector.shape_cast %6 : vector<8xf32> to vector<8x1xf32>
    %8 = arith.mulf %1, %1 : vector<8x32xf32>
    %cst_4 = arith.constant dense<0.000000e+00> : vector<8xf32>
    %9 = vector.multi_reduction <add>, %8, %cst_4 [1] : vector<8x32xf32> to vector<8xf32>
    %10 = vector.shape_cast %9 : vector<8xf32> to vector<8x1xf32>
    %11 = arith.mulf %7, %10 : vector<8x1xf32>
    %cst_5 = arith.constant 1.000000e-16 : f32
    %12 = vector.broadcast %cst_5 : f32 to vector<8x1xf32>
    %13 = arith.maximumf %11, %12 : vector<8x1xf32>
    %14 = math.rsqrt %13 : vector<8x1xf32>
    %15 = arith.mulf %4, %14 : vector<8x1xf32>
    %cst_6 = arith.constant 1.000000e+00 : f32
    %16 = vector.broadcast %cst_6 : f32 to vector<8x1xf32>
    %17 = arith.subf %16, %15 : vector<8x1xf32>
    %c0_7 = arith.constant 0 : index
    %c0_8 = arith.constant 0 : index
    %18 = vector.load %arg3[%c0_7, %c0_8] : memref<8x1xf32, #tpu.memory_space<vmem>>, vector<8x1xf32>
    tpu.vector_store %arg3[%c0_7, %c0_8], %17 {strides = array<i32>} : memref<8x1xf32, #tpu.memory_space<vmem>>, vector<8x1xf32>,
    return
  }
  func.func @transform_0(%arg0: i32) -> (i32, i32) {
    %c0_i32 = arith.constant 0 : i32
    %c0_i32_0 = arith.constant 0 : i32
    return %arg0, %c0_i32 : i32, i32
  }
  func.func @transform_1(%arg0: i32) -> (i32, i32) {
    %c0_i32 = arith.constant 0 : i32
    %c0_i32_0 = arith.constant 0 : i32
    return %arg0, %c0_i32 : i32, i32
  }
  func.func @transform_2(%arg0: i32) -> (i32, i32) {
    %c0_i32 = arith.constant 0 : i32
    %c0_i32_0 = arith.constant 0 : i32
    return %arg0, %c0_i32 : i32, i32
  }
}

</mosaic_0001>

<llo_original>
// kernel: tpu_custom_call.1
$region0: #{tpu_custom_call.1}
  #allocation0 [shape = 'u32[]', space=smem, size = 0x4, offset = 0x4, fixed_abs, tag = 'smem constant byte address 0x4 - core index']
  #allocation1 [shape = 'u32[144,128]{1,0:T(1,128)}', space=vmem, size = 0x12000, scoped, tag = 'internal scratch']
  %s0 = inlined_call_operand.hbm [shape: f32[8,32], index: 0, kind: input, shape index: {}]
  %s1 = inlined_call_operand.hbm [shape: f32[8,32], index: 1, kind: input, shape index: {}]
  %s2 = inlined_call_operand.vmem [shape: f32[8,1], index: 2, kind: output, shape index: {}]
  %s3 = sld [smem:[#allocation0]]
  $region26: #{tpu_custom_call.1} parent=0
    _
  %s5 = ssub.s32 1, %s3
  %s6 = scalar_select 0, %s5, %s3
  $region1: #{tpu_custom_call.1} parent=0
    #allocation2 [shape = 'u8[4096]{0}', space=vmem, size = 0x1000, scoped, tag = 'input window, operand 0, single buffered']
    #allocation3 [shape = 's32[1]{0}', space=sflag, size = 0x4, scoped, tag = 'scoped memory for tpu_custom_call.1']
    #allocation4 [shape = 'u8[4096]{0}', space=vmem, size = 0x1000, scoped, tag = 'input window, operand 1, single buffered']
    #allocation5 [shape = 's32[1]{0}', space=sflag, size = 0x4, scoped, tag = 'scoped memory for tpu_custom_call.1']
    %7 = vsyncpa [#allocation3], 0
    %8 = vsyncpa [#allocation5], 0
    // Predicated region
    $region2: #{tpu_custom_call.1} parent=1 // pred_check
      _
    $region3: #{tpu_custom_call.1} parent=1 // pred_check_branch
      %10 = sbr.rel (0) target = $region5
    $region4: #{tpu_custom_call.1} parent=1 // pred_region
      %s12 = ssub.s32 128, 128
      %13 = vsyncadd [#allocation3], %s12
      %s15 = sshll.u32 [#allocation2], 4
      %s16 = int_to_ptr.vmem [resolvable:$true] %s15
      %18 = dma.hbm_to_vmem [thread:$0]  %s0, 128, %s16, [#allocation3]
    $region5: #{tpu_custom_call.1} parent=1 // pred_fallthru
      _
    // Predicated region
    $region6: #{tpu_custom_call.1} parent=1 // pred_check
      _
    $region7: #{tpu_custom_call.1} parent=1 // pred_check_branch
      %20 = sbr.rel (0) target = $region9
    $region8: #{tpu_custom_call.1} parent=1 // pred_region
      %s22 = ssub.s32 128, 128
      %23 = vsyncadd [#allocation5], %s22
      %s25 = sshll.u32 [#allocation4], 4
      %s26 = int_to_ptr.vmem [resolvable:$true] %s25
      %28 = dma.hbm_to_vmem [thread:$0]  %s1, 128, %s26, [#allocation5]
    $region9: #{tpu_custom_call.1} parent=1 // pred_fallthru
      _
    // Predicated region
    $region10: #{tpu_custom_call.1} parent=1 // pred_check
      _
    $region11: #{tpu_custom_call.1} parent=1 // pred_check_branch
      %30 = sbr.rel (0) target = $region13
    $region12: #{tpu_custom_call.1} parent=1 // pred_region
      %31 = dma.done [#allocation3], 128
    $region13: #{tpu_custom_call.1} parent=1 // pred_fallthru
      _
    // Predicated region
    $region14: #{tpu_custom_call.1} parent=1 // pred_check
      _
    $region15: #{tpu_custom_call.1} parent=1 // pred_check_branch
      %33 = sbr.rel (0) target = $region17
    $region16: #{tpu_custom_call.1} parent=1 // pred_region
      %34 = dma.done [#allocation5], 128
    $region17: #{tpu_custom_call.1} parent=1 // pred_fallthru
      _
    %v35 = vld [vmem:[#allocation2] sm:$0xff]
    %v36 = vld [vmem:[#allocation4] sm:$0xff]
    %v37 = vmul.f32 %v35, %v36
    %vm38 = vcmask 261120
    %v39 = vsel %vm38, %v37, 0.0
    %40 = vadd.xlane.f32.xlu0 %v39
    %v41 = vpop.xlane.xlu0 %40
    %v42 = vmul.f32 %v35, %v35
    %v43 = vsel %vm38, %v42, 0.0
    %44 = vadd.xlane.f32.xlu0 %v43
    %v45 = vpop.xlane.xlu0 %44
    %v46 = vmul.f32 %v36, %v36
    %v47 = vsel %vm38, %v46, 0.0
    %48 = vadd.xlane.f32.xlu0 %v47
    %v49 = vpop.xlane.xlu0 %48
    %v50 = vmul.f32 %v45, %v49
    %v51 = vmax.f32 %v50, 1e-16
    %v52 = vrsqrt.pop %v51
    %v53 = vmul.f32 %v41, %v52
    %v54 = vsub.f32 1.0, %v53
    %vm55 = vcmask 7168
    %56 = vst.msk [vmem:[%s2] sm:$0xff] %vm55, %v54
    // Predicated region
    $region18: #{tpu_custom_call.1} parent=1 // pred_check
      _
    $region19: #{tpu_custom_call.1} parent=1 // pred_check_branch
      %58 = sbr.rel (0) target = $region21
    $region20: #{tpu_custom_call.1} parent=1 // pred_region
      _
    $region21: #{tpu_custom_call.1} parent=1 // pred_fallthru
      _
    // Predicated region
    $region22: #{tpu_custom_call.1} parent=1 // pred_check
      _
    $region23: #{tpu_custom_call.1} parent=1 // pred_check_branch
      %60 = sbr.rel (0) target = $region25
    $region24: #{tpu_custom_call.1} parent=1 // pred_region
      _
    $region25: #{tpu_custom_call.1} parent=1 // pred_fallthru
      _
    %61 = vsyncpa [#allocation3], 1
    %62 = vsyncpa [#allocation5], 1

</llo_original>
